<compile_context>
chip_gen: v7x
topology: tpu7x:2x2x1
jax: 0.10.0
libtpu: 0.0.40
codegen_flags: <defaults>
</compile_context>

<pallas_src>
import jax
import jax.numpy as jnp
from jax import lax
from jax.experimental import pallas as pl
from jax.experimental.pallas import tpu as pltpu

EPS = 1e-5
CLAMP = 5.0
_VMEM_LIMIT = 32 * 1024 * 1024  # safe on v5e/v6e (128 MiB) and v7x (64 MiB physical)


# --------------------------------------------------------------------------- #
# Kernels
# --------------------------------------------------------------------------- #
def _stats_kernel(x_ref, pivot_ref, sum_ref, sumsq_ref):
    """Accumulate pivot-shifted column sum / sum-of-squares across the batch grid."""
    @pl.when(pl.program_id(0) == 0)
    def _():
        sum_ref[...] = jnp.zeros_like(sum_ref)
        sumsq_ref[...] = jnp.zeros_like(sumsq_ref)

    # single pass: shifted sum + shifted sum-of-squares (stable vs. cancellation)
    xs = x_ref[...].astype(jnp.float32) - pivot_ref[...]        # (TB, DL)
    sum_ref[...] += jnp.sum(xs, axis=0, keepdims=True)          # (1, DL)
    sumsq_ref[...] += jnp.sum(xs * xs, axis=0, keepdims=True)   # (1, DL)


def _normalize_kernel(x_ref, mean_ref, inv_std_ref, y_ref):
    """y = clamp((x - mean) * inv_std, -5, 5); inv_std precomputed per lane row."""
    x = x_ref[...].astype(jnp.float32)
    y = (x - mean_ref[...]) * inv_std_ref[...]
    y_ref[...] = jnp.clip(y, -CLAMP, CLAMP).astype(y_ref.dtype)


# --------------------------------------------------------------------------- #
# Wrapper helpers
# --------------------------------------------------------------------------- #
def _lane_fold(B, D):
    """k such that (B, D) -> (B//k, k*D) makes the lane dim 128-wide, else 1."""
    if D < 128 and 128 % D == 0 and B % (128 // D) == 0:
        return 128 // D
    return 1


def _row_tile(B2, DL, itemsize, target_bytes):
    """Pick a row-tile size and padded row count (tile divides padded rows)."""
    max_rows = max(8, int(target_bytes) // (DL * itemsize))
    if B2 <= max_rows:
        return B2, B2                       # one block covering the whole batch
    tb = (max_rows // 8) * 8                # multiple of 8 sublanes
    padded = -(-B2 // tb) * tb              # round up to a multiple of tb
    return tb, padded


# --------------------------------------------------------------------------- #
# Forward
# --------------------------------------------------------------------------- #
def running_mean_std_forward(x, running_mean, running_var, count, training=True,
                             target_block_bytes=1 << 20):
    """RunningMeanStd forward (per_channel=False, norm_only=False, unnorm=False).

    x: (B, D). running_mean/running_var: (D,). count: scalar.
    Returns (y, new_mean, new_var, new_count) if training else y.
    y has the same dtype as x; stats math is float32.
    """
    B, D = x.shape
    out_dtype = x.dtype
    mean_f32 = running_mean.astype(jnp.float32)
    var_f32 = running_var.astype(jnp.float32)
    count_f32 = jnp.asarray(count, jnp.float32)

    # lane-dense layout: fold k consecutive batch rows into the lane dimension
    k = _lane_fold(B, D)
    B2, DL = B // k, k * D
    x2 = x.reshape(B2, DL)
    pivot_row = jnp.tile(mean_f32.reshape(1, D), (1, k))        # (1, DL)

    tb, b2p = _row_tile(B2, DL, x2.dtype.itemsize, target_block_bytes)
    if b2p != B2:
        # pad with pivot rows: they contribute exactly zero to the shifted sums
        pad_rows = jnp.broadcast_to(pivot_row.astype(x2.dtype), (b2p - B2, DL))
        x2p = jnp.concatenate([x2, pad_rows], axis=0)
    else:
        x2p = x2
    grid = (b2p // tb,)
    in_bytes = b2p * DL * x2.dtype.itemsize

    if training:
        ssum, ssq = pl.pallas_call(
            _stats_kernel,
            out_shape=(jax.ShapeDtypeStruct((1, DL), jnp.float32),
                       jax.ShapeDtypeStruct((1, DL), jnp.float32)),
            grid=grid,
            in_specs=[pl.BlockSpec((tb, DL), lambda i: (i, 0)),
                      pl.BlockSpec((1, DL), lambda i: (0, 0))],
            out_specs=(pl.BlockSpec((1, DL), lambda i: (0, 0)),
                       pl.BlockSpec((1, DL), lambda i: (0, 0))),
            compiler_params=pltpu.CompilerParams(
                dimension_semantics=("arbitrary",),        # reduction axis
                vmem_limit_bytes=_VMEM_LIMIT),
            cost_estimate=pl.CostEstimate(
                flops=4 * b2p * DL, transcendentals=0,
                bytes_accessed=in_bytes + 3 * DL * 4),
        )(x2p, pivot_row)

        # O(D) Welford merge of batch moments into running stats (tiny; plain JAX).
        n = jnp.float32(B)
        s = ssum.reshape(k, D).sum(axis=0)          # sum(x - pivot)       (D,)
        q = ssq.reshape(k, D).sum(axis=0)           # sum((x - pivot)**2)  (D,)
        batch_mean = mean_f32 + s / n
        batch_var = (q - s * s / n) / (n - 1.0)     # unbiased, matches torch .var()
        delta = batch_mean - mean_f32
        tot = count_f32 + n
        new_mean = mean_f32 + delta * (n / tot)
        m2 = var_f32 * count_f32 + batch_var * n + delta * delta * (count_f32 * n / tot)
        new_var = m2 / tot
        cur_mean, cur_var, new_count = new_mean, new_var, tot
    else:
        cur_mean, cur_var = mean_f32, var_f32

    # hoist rsqrt off the per-element path: one (D,) rsqrt, B*D multiplies
    inv_std = lax.rsqrt(cur_var + jnp.float32(EPS))
    mean_row = jnp.tile(cur_mean.reshape(1, D), (1, k))          # (1, DL)
    inv_row = jnp.tile(inv_std.reshape(1, D), (1, k))            # (1, DL)

    y2 = pl.pallas_call(
        _normalize_kernel,
        out_shape=jax.ShapeDtypeStruct((b2p, DL), out_dtype),
        grid=grid,
        in_specs=[pl.BlockSpec((tb, DL), lambda i: (i, 0)),
                  pl.BlockSpec((1, DL), lambda i: (0, 0)),
                  pl.BlockSpec((1, DL), lambda i: (0, 0))],
        out_specs=pl.BlockSpec((tb, DL), lambda i: (i, 0)),
        compiler_params=pltpu.CompilerParams(
            dimension_semantics=("parallel",),               # elementwise: shard TCs
            vmem_limit_bytes=_VMEM_LIMIT),
        cost_estimate=pl.CostEstimate(
            flops=3 * b2p * DL, transcendentals=0,
            bytes_accessed=in_bytes + b2p * DL * jnp.dtype(out_dtype).itemsize),
    )(x2p, mean_row, inv_row)

    y = y2[:B2].reshape(B, D)
    if training:
        return y, new_mean, new_var, new_count
    return y


# --------------------------------------------------------------------------- #
# Plain-JAX reference mirroring the PyTorch training forward
# --------------------------------------------------------------------------- #
def _reference_forward(x, mean, var, count):
    b = x.shape[0]
    bmean = jnp.mean(x, axis=0)
    bvar = jnp.var(x, axis=0, ddof=1)
    delta = bmean - mean
    tot = count + b
    new_mean = mean + delta * b / tot
    m2 = var * count + bvar * b + delta ** 2 * count * b / tot
    new_var = m2 / tot
    y = jnp.clip((x - new_mean) / jnp.sqrt(new_var + EPS), -CLAMP, CLAMP)
    return y, new_mean, new_var, tot


if __name__ == "__main__":
    key = jax.random.PRNGKey(0)
    k1, k2 = jax.random.split(key)

    D = 32  # in_shape = (32,)
    running_mean = jnp.zeros((D,), dtype=jnp.float32)
    running_var = jnp.ones((D,), dtype=jnp.float32)
    count = jnp.ones((), dtype=jnp.float32)

    # --- small shape: batch=8, features=32 (folds to a single (2, 128) block) ---
    B = 8
    x = jax.random.normal(k1, (B, D), dtype=jnp.float32) * 2.0 + 0.5

    y, new_mean, new_var, new_count = running_mean_std_forward(
        x, running_mean, running_var, count, training=True)
    jax.block_until_ready((y, new_mean, new_var, new_count))

    y_ref, m_ref, v_ref, c_ref = _reference_forward(x, running_mean, running_var, count)
    assert jnp.allclose(y, y_ref, atol=1e-5, rtol=1e-5)
    assert jnp.allclose(new_mean, m_ref, atol=1e-5, rtol=1e-5)
    assert jnp.allclose(new_var, v_ref, atol=1e-5, rtol=1e-5)
    assert jnp.allclose(new_count, c_ref, atol=1e-5, rtol=1e-5)

    # --- eval path with the updated stats ---
    y_eval = running_mean_std_forward(x, new_mean, new_var, new_count, training=False)
    jax.block_until_ready(y_eval)
    y_eval_ref = jnp.clip((x - new_mean) / jnp.sqrt(new_var + EPS), -CLAMP, CLAMP)
    assert jnp.allclose(y_eval, y_eval_ref, atol=1e-5, rtol=1e-5)

    # --- exercise the multi-step grid + row-padding path (tiny tile on purpose) ---
    Bb = 520
    xb = jax.random.normal(k2, (Bb, D), dtype=jnp.float32) * 3.0 - 1.0
    yb, nmb, nvb, ncb = running_mean_std_forward(
        xb, running_mean, running_var, count, training=True, target_block_bytes=4096)
    jax.block_until_ready((yb, nmb, nvb, ncb))
    yb_ref, mb_ref, vb_ref, cb_ref = _reference_forward(xb, running_mean, running_var, count)
    assert jnp.allclose(yb, yb_ref, atol=1e-4, rtol=1e-4)
    assert jnp.allclose(nmb, mb_ref, atol=1e-4, rtol=1e-4)
    assert jnp.allclose(nvb, vb_ref, atol=1e-4, rtol=1e-4)
    assert jnp.allclose(ncb, cb_ref, atol=1e-4, rtol=1e-4)

    print("KERNEL_OK")
</pallas_src>

<mosaic_0001>
module attributes {stable_mosaic.version = 11 : i64} {
  func.func @_stats_kernel(%arg0: i32, %arg1: memref<2x128xf32, #tpu.memory_space<vmem>>, %arg2: memref<1x128xf32, #tpu.memory_space<vmem>>, %arg3: memref<1x128xf32, #tpu.memory_space<vmem>>, %arg4: memref<1x128xf32, #tpu.memory_space<vmem>>) attributes {dimension_semantics = [#tpu.dimension_semantics<arbitrary>], iteration_bounds = array<i64: 1>, scalar_prefetch = 0 : i64, scratch_operands = 0 : i64, tpu.core_type = #tpu.core_type<tc>, window_params = [{transform_indices = @transform_0, window_bounds = array<i64: 2, 128>}, {pipeline_mode = #tpu.pipeline_mode<synchronous>, transform_indices = @transform_1, window_bounds = array<i64: 1, 128>}, {pipeline_mode = #tpu.pipeline_mode<synchronous>, transform_indices = @transform_2, window_bounds = array<i64: 1, 128>}, {pipeline_mode = #tpu.pipeline_mode<synchronous>, transform_indices = @transform_3, window_bounds = array<i64: 1, 128>}]} {
    %c0_i32 = arith.constant 0 : i32
    %0 = arith.cmpi eq, %arg0, %c0_i32 : i32
    %1 = arith.extui %0 : i1 to i32
    %c0_i32_0 = arith.constant 0 : i32
    %2 = arith.cmpi ne, %1, %c0_i32_0 : i32
    scf.if %2 {
      %cst_13 = arith.constant 0.000000e+00 : f32
      %18 = vector.broadcast %cst_13 : f32 to vector<1x128xf32>
      %c0_14 = arith.constant 0 : index
      %c0_15 = arith.constant 0 : index
      %19 = vector.load %arg3[%c0_14, %c0_15] : memref<1x128xf32, #tpu.memory_space<vmem>>, vector<1x128xf32>
      tpu.vector_store %arg3[%c0_14, %c0_15], %18 {strides = array<i32>} : memref<1x128xf32, #tpu.memory_space<vmem>>, vector<1x128xf32>,
      %cst_16 = arith.constant 0.000000e+00 : f32
      %20 = vector.broadcast %cst_16 : f32 to vector<1x128xf32>
      %c0_17 = arith.constant 0 : index
      %c0_18 = arith.constant 0 : index
      %21 = vector.load %arg4[%c0_17, %c0_18] : memref<1x128xf32, #tpu.memory_space<vmem>>, vector<1x128xf32>
      tpu.vector_store %arg4[%c0_17, %c0_18], %20 {strides = array<i32>} : memref<1x128xf32, #tpu.memory_space<vmem>>, vector<1x128xf32>,
    } else {
    }
    %c0 = arith.constant 0 : index
    %c0_1 = arith.constant 0 : index
    %3 = vector.load %arg1[%c0, %c0_1] : memref<2x128xf32, #tpu.memory_space<vmem>>, vector<2x128xf32>
    %c0_2 = arith.constant 0 : index
    %c0_3 = arith.constant 0 : index
    %4 = vector.load %arg2[%c0_2, %c0_3] : memref<1x128xf32, #tpu.memory_space<vmem>>, vector<1x128xf32>
    %5 = vector.broadcast %4 : vector<1x128xf32> to vector<2x128xf32>
    %6 = arith.subf %3, %5 : vector<2x128xf32>
    %c0_4 = arith.constant 0 : index
    %c0_5 = arith.constant 0 : index
    %7 = vector.load %arg3[%c0_4, %c0_5] : memref<1x128xf32, #tpu.memory_space<vmem>>, vector<1x128xf32>
    %cst = arith.constant dense<0.000000e+00> : vector<128xf32>
    %8 = vector.multi_reduction <add>, %6, %cst [0] : vector<2x128xf32> to vector<128xf32>
    %9 = vector.shape_cast %8 : vector<128xf32> to vector<1x128xf32>
    %10 = arith.addf %7, %9 : vector<1x128xf32>
    %c0_6 = arith.constant 0 : index
    %c0_7 = arith.constant 0 : index
    %11 = vector.load %arg3[%c0_6, %c0_7] : memref<1x128xf32, #tpu.memory_space<vmem>>, vector<1x128xf32>
    tpu.vector_store %arg3[%c0_6, %c0_7], %10 {strides = array<i32>} : memref<1x128xf32, #tpu.memory_space<vmem>>, vector<1x128xf32>,
    %c0_8 = arith.constant 0 : index
    %c0_9 = arith.constant 0 : index
    %12 = vector.load %arg4[%c0_8, %c0_9] : memref<1x128xf32, #tpu.memory_space<vmem>>, vector<1x128xf32>
    %13 = arith.mulf %6, %6 : vector<2x128xf32>
    %cst_10 = arith.constant dense<0.000000e+00> : vector<128xf32>
    %14 = vector.multi_reduction <add>, %13, %cst_10 [0] : vector<2x128xf32> to vector<128xf32>
    %15 = vector.shape_cast %14 : vector<128xf32> to vector<1x128xf32>
    %16 = arith.addf %12, %15 : vector<1x128xf32>
    %c0_11 = arith.constant 0 : index
    %c0_12 = arith.constant 0 : index
    %17 = vector.load %arg4[%c0_11, %c0_12] : memref<1x128xf32, #tpu.memory_space<vmem>>, vector<1x128xf32>
    tpu.vector_store %arg4[%c0_11, %c0_12], %16 {strides = array<i32>} : memref<1x128xf32, #tpu.memory_space<vmem>>, vector<1x128xf32>,
    return
  }
  func.func @transform_0(%arg0: i32) -> (i32, i32) {
    %c0_i32 = arith.constant 0 : i32
    %c0_i32_0 = arith.constant 0 : i32
    return %arg0, %c0_i32 : i32, i32
  }
  func.func @transform_1(%arg0: i32) -> (i32, i32) {
    %c0_i32 = arith.constant 0 : i32
    %c0_i32_0 = arith.constant 0 : i32
    %c0_i32_1 = arith.constant 0 : i32
    return %c0_i32, %c0_i32_0 : i32, i32
  }
  func.func @transform_2(%arg0: i32) -> (i32, i32) {
    %c0_i32 = arith.constant 0 : i32
    %c0_i32_0 = arith.constant 0 : i32
    %c0_i32_1 = arith.constant 0 : i32
    return %c0_i32, %c0_i32_0 : i32, i32
  }
  func.func @transform_3(%arg0: i32) -> (i32, i32) {
    %c0_i32 = arith.constant 0 : i32
    %c0_i32_0 = arith.constant 0 : i32
    %c0_i32_1 = arith.constant 0 : i32
    return %c0_i32, %c0_i32_0 : i32, i32
  }
}

</mosaic_0001>

<llo_original>
// kernel: tpu_custom_call.1
$region0: #{tpu_custom_call.1}
  #allocation0 [shape = 'u32[]', space=smem, size = 0x4, offset = 0x4, fixed_abs, tag = 'smem constant byte address 0x4 - core index']
  #allocation1 [shape = 'u32[144,128]{1,0:T(1,128)}', space=vmem, size = 0x12000, scoped, tag = 'internal scratch']
  %s0 = inlined_call_operand.hbm [shape: f32[2,128], index: 0, kind: input, shape index: {}]
  %s1 = inlined_call_operand.vmem [shape: f32[1,128], index: 1, kind: input, shape index: {}]
  %s2 = inlined_call_operand.hbm [shape: f32[1,128], index: 2, kind: output, shape index: {0}]
  %s3 = inlined_call_operand.hbm [shape: f32[1,128], index: 3, kind: output, shape index: {1}]
  %4 = xla_tuple %s2, %s3
  %s5 = sld [smem:[#allocation0]]
  $region34: #{tpu_custom_call.1} parent=0
    _
  %s7 = ssub.s32 1, %s5
  %s8 = scalar_select 0, %s7, %s5
  $region1: #{tpu_custom_call.1} parent=0
    #allocation2 [shape = 'u8[1024]{0}', space=vmem, size = 0x400, scoped, tag = 'input window, operand 0, single buffered']
    #allocation3 [shape = 's32[1]{0}', space=sflag, size = 0x4, scoped, tag = 'scoped memory for tpu_custom_call.1']
    #allocation4 [shape = 's32[1]{0}', space=sflag, size = 0x4, scoped, tag = 'scoped memory for tpu_custom_call.1']
    #allocation5 [shape = 'u8[512]{0}', space=vmem, size = 0x400, scoped, tag = 'output window, operand 0, single buffered']
    #allocation6 [shape = 'u8[512]{0}', space=vmem, size = 0x400, scoped, tag = 'output window, operand 1, single buffered']
    #allocation7 [shape = 's32[1]{0}', space=sflag, size = 0x4, scoped, tag = 'scoped memory for tpu_custom_call.1']
    %9 = vsyncpa [#allocation3], 0
    %10 = vsyncpa [#allocation4], 0
    %11 = vsyncpa [#allocation7], 0
    // Predicated region
    $region2: #{tpu_custom_call.1} parent=1 // pred_check
      _
    $region3: #{tpu_custom_call.1} parent=1 // pred_check_branch
      %13 = sbr.rel (0) target = $region5
    $region4: #{tpu_custom_call.1} parent=1 // pred_region
      %s15 = ssub.s32 32, 32
      %16 = vsyncadd [#allocation3], %s15
      %s18 = sshll.u32 [#allocation2], 4
      %s19 = int_to_ptr.vmem [resolvable:$true] %s18
      %21 = dma.hbm_to_vmem [thread:$0]  %s0, 32, %s19, [#allocation3]
    $region5: #{tpu_custom_call.1} parent=1 // pred_fallthru
      _
    // Predicated region
    $region6: #{tpu_custom_call.1} parent=1 // pred_check
      _
    $region7: #{tpu_custom_call.1} parent=1 // pred_check_branch
      %23 = sbr.rel (0) target = $region9
    $region8: #{tpu_custom_call.1} parent=1 // pred_region
      _
    $region9: #{tpu_custom_call.1} parent=1 // pred_fallthru
      _
    // Predicated region
    $region10: #{tpu_custom_call.1} parent=1 // pred_check
      _
    $region11: #{tpu_custom_call.1} parent=1 // pred_check_branch
      %25 = sbr.rel (0) target = $region13
    $region12: #{tpu_custom_call.1} parent=1 // pred_region
      %26 = dma.done [#allocation3], 32
    $region13: #{tpu_custom_call.1} parent=1 // pred_fallthru
      _
    %p27 = scmp.eq.s32.totalorder 0, 0
    // Predicated region
    $region14: #{tpu_custom_call.1} parent=1 // pred_check
      %p28 = pneg %p27
    $region15: #{tpu_custom_call.1} parent=1 // pred_check_branch
      %30 = sbr.rel (%p28) target = $region17
    $region16: #{tpu_custom_call.1} parent=1 // pred_region
      %31 = vst [vmem:[#allocation5] sm:$0x1] 0.0
      %32 = vst [vmem:[#allocation6] sm:$0x1] 0.0
    $region17: #{tpu_custom_call.1} parent=1 // pred_fallthru
      _
    %v33 = vld [vmem:[#allocation2] sm:$0x3]
    %v34 = vld [vmem:[%s1] sm:$0x1]
    %v36 = vlaneseq
    %v37 = vshrl.u32 %v36, 7
    %v38 = vsub.s32 0, %v37
    %v39 = vrot.slane %v34, %v38
    %v41 = vsub.f32 %v33, %v39
    %v42 = vld [vmem:[#allocation5] sm:$0x1]
    %vm43 = vcmask 1041408
    %v44 = vsel %vm43, %v41, 0.0
    %v45 = vrot.slane %v44, 4
    %v46 = vadd.f32 %v44, %v45
    %v47 = vrot.slane %v46, 2
    %v48 = vadd.f32 %v46, %v47
    %v49 = vrot.slane %v48, 1
    %v50 = vadd.f32 %v48, %v49
    %v51 = vadd.f32 %v42, %v50
    %52 = vst [vmem:[#allocation5] sm:$0x1] %v51
    %v53 = vld [vmem:[#allocation6] sm:$0x1]
    %v54 = vmul.f32 %v41, %v41
    %v55 = vsel %vm43, %v54, 0.0
    %v56 = vrot.slane %v55, 4
    %v57 = vadd.f32 %v55, %v56
    %v58 = vrot.slane %v57, 2
    %v59 = vadd.f32 %v57, %v58
    %v60 = vrot.slane %v59, 1
    %v61 = vadd.f32 %v59, %v60
    %v62 = vadd.f32 %v53, %v61
    %63 = vst [vmem:[#allocation6] sm:$0x1] %v62
    // Predicated region
    $region18: #{tpu_custom_call.1} parent=1 // pred_check
      _
    $region19: #{tpu_custom_call.1} parent=1 // pred_check_branch
      %65 = sbr.rel (0) target = $region21
    $region20: #{tpu_custom_call.1} parent=1 // pred_region
      %s67 = ssub.s32 16, 16
      %68 = vsyncadd [#allocation4], %s67
      %s70 = sshll.u32 [#allocation5], 4
      %s71 = int_to_ptr.vmem [resolvable:$true] %s70
      %73 = dma.vmem_to_hbm [thread:$0]  %s71, 16, %s2, [#allocation4]
    $region21: #{tpu_custom_call.1} parent=1 // pred_fallthru
      _
    // Predicated region
    $region22: #{tpu_custom_call.1} parent=1 // pred_check
      _
    $region23: #{tpu_custom_call.1} parent=1 // pred_check_branch
      %75 = sbr.rel (0) target = $region25
    $region24: #{tpu_custom_call.1} parent=1 // pred_region
      %s77 = ssub.s32 16, 16
      %78 = vsyncadd [#allocation7], %s77
      %s80 = sshll.u32 [#allocation6], 4
      %s81 = int_to_ptr.vmem [resolvable:$true] %s80
      %83 = dma.vmem_to_hbm [thread:$0]  %s81, 16, %s3, [#allocation7]
    $region25: #{tpu_custom_call.1} parent=1 // pred_fallthru
      _
    // Predicated region
    $region26: #{tpu_custom_call.1} parent=1 // pred_check
      _
    $region27: #{tpu_custom_call.1} parent=1 // pred_check_branch
      %85 = sbr.rel (0) target = $region29
    $region28: #{tpu_custom_call.1} parent=1 // pred_region
      %86 = dma.done [#allocation4], 16
    $region29: #{tpu_custom_call.1} parent=1 // pred_fallthru
      _
    // Predicated region
    $region30: #{tpu_custom_call.1} parent=1 // pred_check
      _
    $region31: #{tpu_custom_call.1} parent=1 // pred_check_branch
      %88 = sbr.rel (0) target = $region33
    $region32: #{tpu_custom_call.1} parent=1 // pred_region
      %89 = dma.done [#allocation7], 16
    $region33: #{tpu_custom_call.1} parent=1 // pred_fallthru
      _
    %90 = vsyncpa [#allocation3], 1
    %91 = vsyncpa [#allocation4], 1
    %92 = vsyncpa [#allocation7], 1

</llo_original>
